<compile_context>
chip_gen: v5e
topology: v5e:2x2
jax: 0.10.0
libtpu: 0.0.40
codegen_flags: <defaults>
</compile_context>

<pallas_src>
import jax
import jax.numpy as jnp
from jax.experimental import pallas as pl
from jax.experimental.pallas import tpu as pltpu


def mlp_kernel(x_ref, params_ref, b2_ref, o_ref):
    # x      : (1, N)         -- batch on the lane axis (VMEM)
    # params : (n_hidden, 3)  -- lane 0: w1, lane 1: b1, lane 2: w2 (VMEM)
    # b2     : (1, 1)         -- output bias scalar (SMEM)
    # o      : (1, N)         -- output row (VMEM)
    x_row = x_ref[...]                              # (1, N)
    params = params_ref[...]                        # (n_hidden, 3)
    w1 = params[:, 0:1]                             # (n_hidden, 1)
    b1 = params[:, 1:2]                             # (n_hidden, 1)
    w2 = params[:, 2:3]                             # (n_hidden, 1)

    # hidden = relu(W1 * x + b1): K=1 outer product -> pure VPU broadcast FMA.
    h = jnp.maximum(w1 * x_row + b1, 0.0)           # (n_hidden, N)

    # out = W2^T @ h + b2: n_out=1 matvec -> sublane (XLU) reduce + sreg splat.
    o = jnp.sum(w2 * h, axis=0, keepdims=True) + b2_ref[0, 0]   # (1, N)
    o_ref[...] = o.astype(o_ref.dtype)


@jax.jit
def net_forward(x, w1, b1, w2, b2):
    """Pallas equivalent of Net.forward: predict(relu(hidden(x))).

    x:  (N, n_in)        float32, n_in == 1
    w1: (n_in, n_hidden) (transposed vs. PyTorch's (out, in))
    b1: (1, n_hidden)
    w2: (n_hidden, n_out), n_out == 1
    b2: (1, n_out)
    """
    N, n_in = x.shape
    n_hidden = w1.shape[1]
    n_out = w2.shape[1]
    assert n_in == 1 and n_out == 1, "kernel specialized for the 1->H->1 MLP"

    # Free reshape (n_in == 1): batch moves to the lane axis, no transpose copy.
    x_row = x.reshape(n_in, N)                                  # (1, N)
    # Pack the three (n_hidden,) parameter columns into one VMEM tile.
    params = jnp.concatenate([w1.T, b1.T, w2], axis=1)          # (n_hidden, 3)

    vmem = pl.BlockSpec(memory_space=pltpu.MemorySpace.VMEM)
    smem = pl.BlockSpec(memory_space=pltpu.MemorySpace.SMEM)

    o_row = pl.pallas_call(
        mlp_kernel,
        out_shape=jax.ShapeDtypeStruct((n_out, N), x.dtype),
        in_specs=[vmem, vmem, smem],
        out_specs=vmem,
    )(x_row, params, b2)

    # Free reshape back to the PyTorch (N, n_out) layout.
    return o_row.reshape(N, n_out)


def init_params(key, n_in, n_hidden, n_out):
    """Deterministic init mimicking PyTorch Linear default (uniform +/- 1/sqrt(fan_in))."""
    k1, k2, k3, k4 = jax.random.split(key, 4)
    bound1 = 1.0 / jnp.sqrt(jnp.float32(n_in))
    bound2 = 1.0 / jnp.sqrt(jnp.float32(n_hidden))
    # stored already transposed: (in, out)
    w1 = jax.random.uniform(k1, (n_in, n_hidden), jnp.float32, -bound1, bound1)
    b1 = jax.random.uniform(k2, (1, n_hidden), jnp.float32, -bound1, bound1)
    w2 = jax.random.uniform(k3, (n_hidden, n_out), jnp.float32, -bound2, bound2)
    b2 = jax.random.uniform(k4, (1, n_out), jnp.float32, -bound2, bound2)
    return w1, b1, w2, b2


if __name__ == "__main__":
    # Matches the reference script: x = unsqueeze(linspace(-1, 1, 100), dim=1)
    N, n_in, n_hidden, n_out = 100, 1, 32, 1

    key = jax.random.PRNGKey(0)
    x = jnp.linspace(-1.0, 1.0, N, dtype=jnp.float32).reshape(N, n_in)
    w1, b1, w2, b2 = init_params(key, n_in, n_hidden, n_out)

    out = net_forward(x, w1, b1, w2, b2)
    jax.block_until_ready(out)

    # Pure-JAX reference check of the same forward pass
    ref = jnp.maximum(x @ w1 + b1, 0.0) @ w2 + b2
    assert out.shape == (N, n_out)
    assert jnp.allclose(out, ref, atol=1e-5, rtol=1e-5)

    print("KERNEL_OK")
</pallas_src>

<mosaic_0001>
module attributes {stable_mosaic.version = 11 : i64} {
  func.func @mlp_kernel(%arg0: memref<1x100xf32, #tpu.memory_space<vmem>>, %arg1: memref<32x3xf32, #tpu.memory_space<vmem>>, %arg2: memref<1x1xf32, #tpu.memory_space<smem>>, %arg3: memref<1x100xf32, #tpu.memory_space<vmem>>) attributes {dimension_semantics = [], scalar_prefetch = 0 : i64, scratch_operands = 0 : i64, tpu.core_type = #tpu.core_type<tc>} {
    %c0 = arith.constant 0 : index
    %c0_0 = arith.constant 0 : index
    %0 = vector.load %arg0[%c0, %c0_0] : memref<1x100xf32, #tpu.memory_space<vmem>>, vector<1x100xf32>
    %c0_1 = arith.constant 0 : index
    %c0_2 = arith.constant 0 : index
    %1 = vector.load %arg1[%c0_1, %c0_2] : memref<32x3xf32, #tpu.memory_space<vmem>>, vector<32x3xf32>
    %2 = vector.extract_strided_slice %1 {offsets = [0, 0], sizes = [32, 1], strides = [1, 1]} : vector<32x3xf32> to vector<32x1xf32>
    %3 = vector.extract_strided_slice %1 {offsets = [0, 1], sizes = [32, 1], strides = [1, 1]} : vector<32x3xf32> to vector<32x1xf32>
    %4 = vector.extract_strided_slice %1 {offsets = [0, 2], sizes = [32, 1], strides = [1, 1]} : vector<32x3xf32> to vector<32x1xf32>
    %5 = vector.broadcast %2 : vector<32x1xf32> to vector<32x100xf32>
    %6 = vector.broadcast %0 : vector<1x100xf32> to vector<32x100xf32>
    %7 = arith.mulf %5, %6 : vector<32x100xf32>
    %8 = vector.broadcast %3 : vector<32x1xf32> to vector<32x100xf32>
    %9 = arith.addf %7, %8 : vector<32x100xf32>
    %cst = arith.constant 0.000000e+00 : f32
    %10 = vector.broadcast %cst : f32 to vector<32x100xf32>
    %11 = arith.maximumf %9, %10 : vector<32x100xf32>
    %12 = vector.broadcast %4 : vector<32x1xf32> to vector<32x100xf32>
    %13 = arith.mulf %12, %11 : vector<32x100xf32>
    %cst_3 = arith.constant dense<0.000000e+00> : vector<100xf32>
    %14 = vector.multi_reduction <add>, %13, %cst_3 [0] : vector<32x100xf32> to vector<100xf32>
    %15 = vector.shape_cast %14 : vector<100xf32> to vector<1x100xf32>
    %c0_4 = arith.constant 0 : index
    %c0_5 = arith.constant 0 : index
    %16 = memref.load %arg2[%c0_4, %c0_5] : memref<1x1xf32, #tpu.memory_space<smem>>
    %17 = vector.broadcast %16 : f32 to vector<1x100xf32>
    %18 = arith.addf %15, %17 : vector<1x100xf32>
    %c0_6 = arith.constant 0 : index
    %c0_7 = arith.constant 0 : index
    %19 = vector.load %arg3[%c0_6, %c0_7] : memref<1x100xf32, #tpu.memory_space<vmem>>, vector<1x100xf32>
    tpu.vector_store %arg3[%c0_6, %c0_7], %18 {strides = array<i32>} : memref<1x100xf32, #tpu.memory_space<vmem>>, vector<1x100xf32>,
    return
  }
}

</mosaic_0001>

<llo_original>
// kernel: net_forward.1
$region0: #{net_forward.1}
  #allocation0 [shape = 'u32[]', space=smem, size = 0x4, offset = 0x4, fixed_abs, tag = 'smem constant byte address 0x4 - core index']
  #allocation1 [shape = 'u32[72,128]{1,0:T(1,128)}', space=vmem, size = 0x9000, scoped, tag = 'internal scratch']
  #allocation2 [shape = 'f32[1,1]{1,0:T(1,128)S(6)}', space=smem, size = 0x200, scoped, tag = 'scoped memory for net_forward.1']
  %s0 = inlined_call_operand.vmem [shape: f32[1,100], index: 0, kind: input, shape index: {}]
  %s1 = inlined_call_operand.vmem [shape: f32[32,3], index: 1, kind: input, shape index: {}]
  %s2 = inlined_call_operand.<no memory space> [shape: f32[1,1], index: 2, kind: input, shape index: {}]
  %s3 = inlined_call_operand.hbm [shape: f32[1,100], index: 3, kind: output, shape index: {}]
  %s4 = sld [smem:[#allocation0]]
  $region22: #{net_forward.1} parent=0
    _
  %s6 = ssub.s32 1, %s4
  %s7 = scalar_select 0, %s6, %s4
  %8 = sst [smem:[#allocation2]] %s2
  $region1: #{net_forward.1} parent=0
    #allocation3 [shape = 'u8[512]{0}', space=vmem, size = 0x400, scoped, tag = 'output window, operand 0, single buffered']
    #allocation4 [shape = 's32[1]{0}', space=sflag, size = 0x4, scoped, tag = 'scoped memory for net_forward.1']
    %9 = vsyncpa [#allocation4], 0
    // Predicated region
    $region2: #{net_forward.1} parent=1 // pred_check
      _
    $region3: #{net_forward.1} parent=1 // pred_check_branch
      %11 = sbr.rel (0) target = $region5
    $region4: #{net_forward.1} parent=1 // pred_region
      _
    $region5: #{net_forward.1} parent=1 // pred_fallthru
      _
    // Predicated region
    $region6: #{net_forward.1} parent=1 // pred_check
      _
    $region7: #{net_forward.1} parent=1 // pred_check_branch
      %13 = sbr.rel (0) target = $region9
    $region8: #{net_forward.1} parent=1 // pred_region
      _
    $region9: #{net_forward.1} parent=1 // pred_fallthru
      _
    // Predicated region
    $region10: #{net_forward.1} parent=1 // pred_check
      _
    $region11: #{net_forward.1} parent=1 // pred_check_branch
      %15 = sbr.rel (0) target = $region13
    $region12: #{net_forward.1} parent=1 // pred_region
      _
    $region13: #{net_forward.1} parent=1 // pred_fallthru
      _
    %v16 = vld [vmem:[%s0] sm:$0x1]
    %v17 = vld [vmem:[%s1] sm:$0xff]
    %v18 = vld [vmem:[%s1 + $0x8] sm:$0xff]
    %v19 = vld [vmem:[%s1 + $0x10] sm:$0xff]
    %v20 = vld [vmem:[%s1 + $0x18] sm:$0xff]
    %22 = vset.pattern.permute.xlu0 0
    %23 = vperm.xlu0 %22, %v17
    %v24 = vpop.permute.xlu0 %23
    %27 = vset.pattern.permute.xlu0 0
    %28 = vperm.xlu0 %27, %v18
    %v29 = vpop.permute.xlu0 %28
    %32 = vset.pattern.permute.xlu0 0
    %33 = vperm.xlu0 %32, %v19
    %v34 = vpop.permute.xlu0 %33
    %37 = vset.pattern.permute.xlu0 0
    %38 = vperm.xlu0 %37, %v20
    %v39 = vpop.permute.xlu0 %38
    %v42 = vperm.slane %v16, 0
    %v44 = vmul.f32 %v24, %v42
    %v45 = vmul.f32 %v29, %v42
    %v46 = vmul.f32 %v34, %v42
    %v47 = vmul.f32 %v39, %v42
    %48 = vset.pattern.permute.xlu0 1
    %49 = vperm.xlu0 %48, %v17
    %v50 = vpop.permute.xlu0 %49
    %52 = vset.pattern.permute.xlu0 1
    %53 = vperm.xlu0 %52, %v18
    %v54 = vpop.permute.xlu0 %53
    %56 = vset.pattern.permute.xlu0 1
    %57 = vperm.xlu0 %56, %v19
    %v58 = vpop.permute.xlu0 %57
    %60 = vset.pattern.permute.xlu0 1
    %61 = vperm.xlu0 %60, %v20
    %v62 = vpop.permute.xlu0 %61
    %v64 = vadd.f32 %v44, %v50
    %v65 = vadd.f32 %v45, %v54
    %v66 = vadd.f32 %v46, %v58
    %v67 = vadd.f32 %v47, %v62
    %v68 = vmax.f32 %v64, 0.0
    %v69 = vmax.f32 %v65, 0.0
    %v70 = vmax.f32 %v66, 0.0
    %v71 = vmax.f32 %v67, 0.0
    %72 = vset.pattern.permute.xlu0 2
    %73 = vperm.xlu0 %72, %v17
    %v74 = vpop.permute.xlu0 %73
    %76 = vset.pattern.permute.xlu0 2
    %77 = vperm.xlu0 %76, %v18
    %v78 = vpop.permute.xlu0 %77
    %80 = vset.pattern.permute.xlu0 2
    %81 = vperm.xlu0 %80, %v19
    %v82 = vpop.permute.xlu0 %81
    %84 = vset.pattern.permute.xlu0 2
    %85 = vperm.xlu0 %84, %v20
    %v86 = vpop.permute.xlu0 %85
    %v88 = vmul.f32 %v74, %v68
    %v89 = vmul.f32 %v78, %v69
    %v90 = vmul.f32 %v82, %v70
    %v91 = vmul.f32 %v86, %v71
    %vm92 = vcmask 818176
    %v93 = vsel %vm92, %v88, 0.0
    %v94 = vsel %vm92, %v89, 0.0
    %v95 = vadd.f32 %v93, %v94
    %v96 = vsel %vm92, %v90, 0.0
    %v97 = vadd.f32 %v95, %v96
    %v98 = vsel %vm92, %v91, 0.0
    %v99 = vadd.f32 %v97, %v98
    %v100 = vrot.slane %v99, 4
    %v101 = vadd.f32 %v99, %v100
    %v102 = vrot.slane %v101, 2
    %v103 = vadd.f32 %v101, %v102
    %v104 = vrot.slane %v103, 1
    %v105 = vadd.f32 %v103, %v104
    %s106 = sld [smem:[#allocation2]]
    %v107 = vstv %s106
    %v108 = vadd.f32 %v105, %v107
    %vm109 = vcmask 811008
    %110 = vst.msk [vmem:[#allocation3] sm:$0x1] %vm109, %v108
    // Predicated region
    $region14: #{net_forward.1} parent=1 // pred_check
      _
    $region15: #{net_forward.1} parent=1 // pred_check_branch
      %112 = sbr.rel (0) target = $region17
    $region16: #{net_forward.1} parent=1 // pred_region
      %114 = vsyncadd [#allocation4], 0
      %s116 = sshll.u32 [#allocation3], 4
      %s117 = int_to_ptr.vmem [resolvable:$true] %s116
      %s118 = sshll.u32 %s3, 4
      %s119 = int_to_ptr.hbm [resolvable:$true] %s118
      %121 = dma.vmem_to_hbm [thread:$0]  %s117, 16, %s119, [#allocation4]
    $region17: #{net_forward.1} parent=1 // pred_fallthru
      _
    // Predicated region
    $region18: #{net_forward.1} parent=1 // pred_check
      _
    $region19: #{net_forward.1} parent=1 // pred_check_branch
      %123 = sbr.rel (0) target = $region21
    $region20: #{net_forward.1} parent=1 // pred_region
      %125 = dma.done [#allocation4], 16
    $region21: #{net_forward.1} parent=1 // pred_fallthru
      _
    %126 = vsyncpa [#allocation4], 1

</llo_original>
